<compile_context>
chip_gen: v5e
topology: v5e:2x2
jax: 0.10.0
libtpu: 0.0.40
codegen_flags: <defaults>
</compile_context>

<pallas_src>
import functools

import jax
import jax.numpy as jnp
from jax.experimental import pallas as pl
from jax.experimental.pallas import tpu as pltpu


def _round_up(n, m):
    return ((n + m - 1) // m) * m


_TM_MAX = 1024  # batch-tile sweep 512-2048 landed at 1024 (85-86% HBM roofline)


def _pick_tm(B):
    """Pick the batch tile (rows per grid step)."""
    if B <= 8:
        return B                      # single block == full array (legal even if < 8)
    if B <= _TM_MAX:
        return (B // 8) * 8           # largest sublane-aligned tile not exceeding B
    # Large batches: keep >= 2 roughly balanced steps so the "parallel" axis
    # can shard across both v7x TensorCores.
    half = (B + 1) // 2
    return min(_TM_MAX, _round_up(half, 8))


def _mlp_kernel(x_ref, w1_ref, b1_ref, w2_ref, b2_ref, w3_ref, b3_ref, out_ref):
    # fc1: Linear(a_dim -> 512) + ReLU.  bf16 MXU operands (x cast in-kernel),
    # f32 accumulate; bias / ReLU / sigmoid stay f32 (no bf16 VPU on v5e).
    x = x_ref[...].astype(jnp.bfloat16)
    h1 = jnp.dot(x, w1_ref[...], preferred_element_type=jnp.float32)
    h1 = jnp.maximum(h1 + b1_ref[...], 0.0)
    # Dropout(p=0.5): identity in eval mode.

    # fc2: Linear(512 -> 128) + ReLU
    h2 = jnp.dot(h1.astype(jnp.bfloat16), w2_ref[...],
                 preferred_element_type=jnp.float32)
    h2 = jnp.maximum(h2 + b2_ref[...], 0.0)
    # Dropout(p=0.5): identity in eval mode.

    # fc3: Linear(128 -> 40, zero-padded to 128 output lanes) + Sigmoid.
    h3 = jnp.dot(h2.astype(jnp.bfloat16), w3_ref[...],
                 preferred_element_type=jnp.float32)
    h3 = h3 + b3_ref[...]
    out_ref[...] = jax.nn.sigmoid(h3).astype(out_ref.dtype)   # bf16, lane-dense


def init_params(key, a_dim, output_dim=40):
    """Deterministic synthetic params. Weights stored as [in, out] (transposed
    vs torch.nn.Linear's [out, in])."""
    ks = jax.random.split(key, 6)

    def lin(kw, kb, fan_in, fan_out):
        bound = 1.0 / jnp.sqrt(fan_in)
        w = jax.random.uniform(kw, (fan_in, fan_out), jnp.float32, -bound, bound)
        b = jax.random.uniform(kb, (1, fan_out), jnp.float32, -bound, bound)
        return w, b

    w1, b1 = lin(ks[0], ks[1], a_dim, 512)
    w2, b2 = lin(ks[2], ks[3], 512, 128)
    w3, b3 = lin(ks[4], ks[5], 128, output_dim)
    return {"w1": w1, "b1": b1, "w2": w2, "b2": b2, "w3": w3, "b3": b3}


def prepare_params(params, a_dim, out_dim):
    """One-time prep: bf16 cast of matmul operands; only fc3's output side is
    zero-padded to 128 lanes (for unmasked stores). fc1 keeps K = a_dim."""
    npad = _round_up(out_dim, 128)  # fc3 output dim, lane-dense stores

    w3 = jnp.zeros((params["w3"].shape[0], npad), jnp.float32)
    w3 = w3.at[:, :out_dim].set(params["w3"])
    b3 = jnp.zeros((1, npad), jnp.float32)
    b3 = b3.at[:, :out_dim].set(params["b3"])

    return {
        "w1": params["w1"].astype(jnp.bfloat16),
        "b1": params["b1"].astype(jnp.float32),
        "w2": params["w2"].astype(jnp.bfloat16),
        "b2": params["b2"].astype(jnp.float32),
        "w3": w3.astype(jnp.bfloat16),
        "b3": b3,
        "a_dim": a_dim,
        "out_dim": out_dim,
    }


@functools.partial(jax.jit, static_argnames=("a_dim", "out_dim"))
def _forward_impl(x, w1, b1, w2, b2, w3, b3, *, a_dim, out_dim):
    B = x.shape[0]
    x2d = x.reshape(B, -1).astype(jnp.float32)   # direct f32 read, no padded copy
    assert x2d.shape[1] == a_dim
    npad = w3.shape[1]

    tm = _pick_tm(B)
    grid = (pl.cdiv(B, tm),)   # partial last block allowed; padded rows discarded

    # Constant index maps: weights/biases DMA'd once, stay VMEM-resident.
    const2d = lambda arr: pl.BlockSpec(arr.shape, lambda i: (0, 0))

    out_pad = pl.pallas_call(
        _mlp_kernel,
        out_shape=jax.ShapeDtypeStruct((B, npad), jnp.bfloat16),
        grid=grid,
        in_specs=[
            # last block dim == full array dim (a_dim), so a 64-wide block is legal
            pl.BlockSpec((tm, a_dim), lambda i: (i, 0)),   # only x tiles advance
            const2d(w1), const2d(b1),
            const2d(w2), const2d(b2),
            const2d(w3), const2d(b3),
        ],
        out_specs=pl.BlockSpec((tm, npad), lambda i: (i, 0)),
        compiler_params=pltpu.CompilerParams(
            dimension_semantics=("parallel",)),
    )(x2d, w1, b1, w2, b2, w3, b3)

    # Drop padded (sigmoid(0)=0.5) output columns; fuses with the kernel under jit.
    return out_pad[:, :out_dim]


def feature_classifier_forward(x, prepared):
    """x: [B, ...] (flattened to [B, a_dim]); prepared: output of prepare_params.
    Returns bf16 [B, out_dim]."""
    return _forward_impl(
        x,
        prepared["w1"], prepared["b1"],
        prepared["w2"], prepared["b2"],
        prepared["w3"], prepared["b3"],
        a_dim=prepared["a_dim"], out_dim=prepared["out_dim"],
    )


if __name__ == "__main__":
    key = jax.random.PRNGKey(0)
    k_x, k_p = jax.random.split(key)

    # args.a_dim = 64; input e.g. [B, 4, 4, 4] flattened by x.view(B, -1)
    B, a_dim, output_dim = 2, 64, 40
    x = jax.random.normal(k_x, (B, 4, 4, 4), jnp.float32)  # flattens to [2, 64]
    raw_params = init_params(k_p, a_dim, output_dim)
    prepared = prepare_params(raw_params, a_dim, output_dim)

    out = feature_classifier_forward(x, prepared)
    out = jax.block_until_ready(out)

    # Pure-JAX reference with the same bf16-operand / f32-accumulate contract.
    # (Kernel additionally rounds the final sigmoid to bf16; tolerance covers it.)
    bf = jnp.bfloat16
    x2d = x.reshape(B, -1)
    h1 = jnp.maximum(
        jnp.dot(x2d.astype(bf), raw_params["w1"].astype(bf),
                preferred_element_type=jnp.float32) + raw_params["b1"], 0.0)
    h2 = jnp.maximum(
        jnp.dot(h1.astype(bf), raw_params["w2"].astype(bf),
                preferred_element_type=jnp.float32) + raw_params["b2"], 0.0)
    ref = jax.nn.sigmoid(
        jnp.dot(h2.astype(bf), raw_params["w3"].astype(bf),
                preferred_element_type=jnp.float32) + raw_params["b3"])

    assert out.shape == (B, output_dim)
    assert out.dtype == jnp.bfloat16
    err = float(jnp.max(jnp.abs(out.astype(jnp.float32) - ref)))
    assert err < 8e-3, err

    print("KERNEL_OK")
</pallas_src>

<mosaic_0001>
module attributes {stable_mosaic.version = 11 : i64} {
  func.func @_mlp_kernel(%arg0: i32, %arg1: memref<2x64xf32, #tpu.memory_space<vmem>>, %arg2: memref<64x512xbf16, #tpu.memory_space<vmem>>, %arg3: memref<1x512xf32, #tpu.memory_space<vmem>>, %arg4: memref<512x128xbf16, #tpu.memory_space<vmem>>, %arg5: memref<1x128xf32, #tpu.memory_space<vmem>>, %arg6: memref<128x128xbf16, #tpu.memory_space<vmem>>, %arg7: memref<1x128xf32, #tpu.memory_space<vmem>>, %arg8: memref<2x128xbf16, #tpu.memory_space<vmem>>) attributes {dimension_semantics = [#tpu.dimension_semantics<parallel>], iteration_bounds = array<i64: 1>, scalar_prefetch = 0 : i64, scratch_operands = 0 : i64, tpu.core_type = #tpu.core_type<tc>, window_params = [{transform_indices = @transform_0, window_bounds = array<i64: 2, 64>}, {pipeline_mode = #tpu.pipeline_mode<synchronous>, transform_indices = @transform_1, window_bounds = array<i64: 64, 512>}, {pipeline_mode = #tpu.pipeline_mode<synchronous>, transform_indices = @transform_2, window_bounds = array<i64: 1, 512>}, {pipeline_mode = #tpu.pipeline_mode<synchronous>, transform_indices = @transform_3, window_bounds = array<i64: 512, 128>}, {pipeline_mode = #tpu.pipeline_mode<synchronous>, transform_indices = @transform_4, window_bounds = array<i64: 1, 128>}, {pipeline_mode = #tpu.pipeline_mode<synchronous>, transform_indices = @transform_5, window_bounds = array<i64: 128, 128>}, {pipeline_mode = #tpu.pipeline_mode<synchronous>, transform_indices = @transform_6, window_bounds = array<i64: 1, 128>}, {transform_indices = @transform_7, window_bounds = array<i64: 2, 128>}]} {
    %c0 = arith.constant 0 : index
    %c0_0 = arith.constant 0 : index
    %0 = vector.load %arg1[%c0, %c0_0] : memref<2x64xf32, #tpu.memory_space<vmem>>, vector<2x64xf32>
    %1 = arith.truncf %0 : vector<2x64xf32> to vector<2x64xbf16>
    %c0_1 = arith.constant 0 : index
    %c0_2 = arith.constant 0 : index
    %2 = vector.load %arg2[%c0_1, %c0_2] : memref<64x512xbf16, #tpu.memory_space<vmem>>, vector<64x512xbf16>
    %cst = arith.constant dense<0.000000e+00> : vector<2x512xf32>
    %3 = tpu.matmul %1, %2, %cst {dimension_numbers = #tpu.dot_dimension_numbers<[1], [0], [0], [1], [0, 0, 1, 1], [], []>} : vector<2x64xbf16>, vector<64x512xbf16>, vector<2x512xf32> -> vector<2x512xf32>
    %c0_3 = arith.constant 0 : index
    %c0_4 = arith.constant 0 : index
    %4 = vector.load %arg3[%c0_3, %c0_4] : memref<1x512xf32, #tpu.memory_space<vmem>>, vector<1x512xf32>
    %5 = vector.broadcast %4 : vector<1x512xf32> to vector<2x512xf32>
    %6 = arith.addf %3, %5 : vector<2x512xf32>
    %cst_5 = arith.constant 0.000000e+00 : f32
    %7 = vector.broadcast %cst_5 : f32 to vector<2x512xf32>
    %8 = arith.maximumf %6, %7 : vector<2x512xf32>
    %9 = arith.truncf %8 : vector<2x512xf32> to vector<2x512xbf16>
    %c0_6 = arith.constant 0 : index
    %c0_7 = arith.constant 0 : index
    %10 = vector.load %arg4[%c0_6, %c0_7] : memref<512x128xbf16, #tpu.memory_space<vmem>>, vector<512x128xbf16>
    %cst_8 = arith.constant dense<0.000000e+00> : vector<2x128xf32>
    %11 = tpu.matmul %9, %10, %cst_8 {dimension_numbers = #tpu.dot_dimension_numbers<[1], [0], [0], [1], [0, 0, 1, 1], [], []>} : vector<2x512xbf16>, vector<512x128xbf16>, vector<2x128xf32> -> vector<2x128xf32>
    %c0_9 = arith.constant 0 : index
    %c0_10 = arith.constant 0 : index
    %12 = vector.load %arg5[%c0_9, %c0_10] : memref<1x128xf32, #tpu.memory_space<vmem>>, vector<1x128xf32>
    %13 = vector.broadcast %12 : vector<1x128xf32> to vector<2x128xf32>
    %14 = arith.addf %11, %13 : vector<2x128xf32>
    %cst_11 = arith.constant 0.000000e+00 : f32
    %15 = vector.broadcast %cst_11 : f32 to vector<2x128xf32>
    %16 = arith.maximumf %14, %15 : vector<2x128xf32>
    %17 = arith.truncf %16 : vector<2x128xf32> to vector<2x128xbf16>
    %c0_12 = arith.constant 0 : index
    %c0_13 = arith.constant 0 : index
    %18 = vector.load %arg6[%c0_12, %c0_13] : memref<128x128xbf16, #tpu.memory_space<vmem>>, vector<128x128xbf16>
    %cst_14 = arith.constant dense<0.000000e+00> : vector<2x128xf32>
    %19 = tpu.matmul %17, %18, %cst_14 {dimension_numbers = #tpu.dot_dimension_numbers<[1], [0], [0], [1], [0, 0, 1, 1], [], []>} : vector<2x128xbf16>, vector<128x128xbf16>, vector<2x128xf32> -> vector<2x128xf32>
    %c0_15 = arith.constant 0 : index
    %c0_16 = arith.constant 0 : index
    %20 = vector.load %arg7[%c0_15, %c0_16] : memref<1x128xf32, #tpu.memory_space<vmem>>, vector<1x128xf32>
    %21 = vector.broadcast %20 : vector<1x128xf32> to vector<2x128xf32>
    %22 = arith.addf %19, %21 : vector<2x128xf32>
    %23 = arith.negf %22 : vector<2x128xf32>
    %24 = math.exp %23 : vector<2x128xf32>
    %cst_17 = arith.constant 1.000000e+00 : f32
    %25 = vector.broadcast %cst_17 : f32 to vector<2x128xf32>
    %26 = arith.addf %25, %24 : vector<2x128xf32>
    %27 = arith.divf %25, %26 : vector<2x128xf32>
    %28 = arith.truncf %27 : vector<2x128xf32> to vector<2x128xbf16>
    %c0_18 = arith.constant 0 : index
    %c0_19 = arith.constant 0 : index
    %29 = vector.load %arg8[%c0_18, %c0_19] : memref<2x128xbf16, #tpu.memory_space<vmem>>, vector<2x128xbf16>
    tpu.vector_store %arg8[%c0_18, %c0_19], %28 {strides = array<i32>} : memref<2x128xbf16, #tpu.memory_space<vmem>>, vector<2x128xbf16>,
    return
  }
  func.func @transform_0(%arg0: i32) -> (i32, i32) {
    %c0_i32 = arith.constant 0 : i32
    %c0_i32_0 = arith.constant 0 : i32
    return %arg0, %c0_i32 : i32, i32
  }
  func.func @transform_1(%arg0: i32) -> (i32, i32) {
    %c0_i32 = arith.constant 0 : i32
    %c0_i32_0 = arith.constant 0 : i32
    %c0_i32_1 = arith.constant 0 : i32
    return %c0_i32, %c0_i32_0 : i32, i32
  }
  func.func @transform_2(%arg0: i32) -> (i32, i32) {
    %c0_i32 = arith.constant 0 : i32
    %c0_i32_0 = arith.constant 0 : i32
    %c0_i32_1 = arith.constant 0 : i32
    return %c0_i32, %c0_i32_0 : i32, i32
  }
  func.func @transform_3(%arg0: i32) -> (i32, i32) {
    %c0_i32 = arith.constant 0 : i32
    %c0_i32_0 = arith.constant 0 : i32
    %c0_i32_1 = arith.constant 0 : i32
    return %c0_i32, %c0_i32_0 : i32, i32
  }
  func.func @transform_4(%arg0: i32) -> (i32, i32) {
    %c0_i32 = arith.constant 0 : i32
    %c0_i32_0 = arith.constant 0 : i32
    %c0_i32_1 = arith.constant 0 : i32
    return %c0_i32, %c0_i32_0 : i32, i32
  }
  func.func @transform_5(%arg0: i32) -> (i32, i32) {
    %c0_i32 = arith.constant 0 : i32
    %c0_i32_0 = arith.constant 0 : i32
    %c0_i32_1 = arith.constant 0 : i32
    return %c0_i32, %c0_i32_0 : i32, i32
  }
  func.func @transform_6(%arg0: i32) -> (i32, i32) {
    %c0_i32 = arith.constant 0 : i32
    %c0_i32_0 = arith.constant 0 : i32
    %c0_i32_1 = arith.constant 0 : i32
    return %c0_i32, %c0_i32_0 : i32, i32
  }
  func.func @transform_7(%arg0: i32) -> (i32, i32) {
    %c0_i32 = arith.constant 0 : i32
    %c0_i32_0 = arith.constant 0 : i32
    return %arg0, %c0_i32 : i32, i32
  }
}

</mosaic_0001>

<llo_original>
// kernel: _forward_impl.1
$region0: #{_forward_impl.1}
  #allocation0 [shape = 'u32[]', space=smem, size = 0x4, offset = 0x4, fixed_abs, tag = 'smem constant byte address 0x4 - core index']
  #allocation1 [shape = 'u32[72,128]{1,0:T(1,128)}', space=vmem, size = 0x9000, scoped, tag = 'internal scratch']
  %s0 = inlined_call_operand.vmem [shape: f32[2,64], index: 0, kind: input, shape index: {}]
  %s1 = inlined_call_operand.hbm [shape: bf16[64,512], index: 1, kind: input, shape index: {}]
  %s2 = inlined_call_operand.vmem [shape: f32[1,512], index: 2, kind: input, shape index: {}]
  %s3 = inlined_call_operand.hbm [shape: bf16[512,128], index: 3, kind: input, shape index: {}]
  %s4 = inlined_call_operand.vmem [shape: f32[1,128], index: 4, kind: input, shape index: {}]
  %s5 = inlined_call_operand.hbm [shape: bf16[128,128], index: 5, kind: input, shape index: {}]
  %s6 = inlined_call_operand.vmem [shape: f32[1,128], index: 6, kind: input, shape index: {}]
  %s7 = inlined_call_operand.hbm [shape: bf16[2,128], index: 7, kind: output, shape index: {}]
  %s8 = sld [smem:[#allocation0]]
  $region50: #{_forward_impl.1} parent=0
    _
  %s10 = ssub.s32 1, %s8
  %s11 = scalar_select 0, %s10, %s8
  $region1: #{_forward_impl.1} parent=0
    #allocation2 [shape = 'u8[65536]{0}', space=vmem, size = 0x10000, scoped, tag = 'input window, operand 1, single buffered']
    #allocation3 [shape = 's32[1]{0}', space=sflag, size = 0x4, scoped, tag = 'scoped memory for _forward_impl.1']
    #allocation4 [shape = 's32[1]{0}', space=sflag, size = 0x4, scoped, tag = 'scoped memory for _forward_impl.1']
    #allocation5 [shape = 'u8[131072]{0}', space=vmem, size = 0x20000, scoped, tag = 'input window, operand 3, single buffered']
    #allocation6 [shape = 's32[1]{0}', space=sflag, size = 0x4, scoped, tag = 'scoped memory for _forward_impl.1']
    #allocation7 [shape = 'u8[32768]{0}', space=vmem, size = 0x8000, scoped, tag = 'input window, operand 5, single buffered']
    #allocation8 [shape = 'u8[512]{0}', space=vmem, size = 0x400, scoped, tag = 'output window, operand 0, single buffered']
    %12 = vsyncpa [#allocation3], 0
    %13 = vsyncpa [#allocation6], 0
    %14 = vsyncpa [#allocation4], 0
    // Predicated region
    $region2: #{_forward_impl.1} parent=1 // pred_check
      _
    $region3: #{_forward_impl.1} parent=1 // pred_check_branch
      %16 = sbr.rel (0) target = $region5
    $region4: #{_forward_impl.1} parent=1 // pred_region
      _
    $region5: #{_forward_impl.1} parent=1 // pred_fallthru
      _
    // Predicated region
    $region6: #{_forward_impl.1} parent=1 // pred_check
      _
    $region7: #{_forward_impl.1} parent=1 // pred_check_branch
      %18 = sbr.rel (0) target = $region9
    $region8: #{_forward_impl.1} parent=1 // pred_region
      %20 = vsyncadd [#allocation3], 0
      %s21 = sshll.u32 %s1, 4
      %s22 = int_to_ptr.hbm [resolvable:$true] %s21
      %s23 = sshll.u32 [#allocation2], 4
      %s24 = int_to_ptr.vmem [resolvable:$true] %s23
      %29 = dma.hbm_to_vmem [thread:$0]  %s22, 2048, %s24, [#allocation3], 256, 256, 16
    $region9: #{_forward_impl.1} parent=1 // pred_fallthru
      _
    // Predicated region
    $region10: #{_forward_impl.1} parent=1 // pred_check
      _
    $region11: #{_forward_impl.1} parent=1 // pred_check_branch
      %31 = sbr.rel (0) target = $region13
    $region12: #{_forward_impl.1} parent=1 // pred_region
      _
    $region13: #{_forward_impl.1} parent=1 // pred_fallthru
      _
    // Predicated region
    $region14: #{_forward_impl.1} parent=1 // pred_check
      _
    $region15: #{_forward_impl.1} parent=1 // pred_check_branch
      %33 = sbr.rel (0) target = $region17
    $region16: #{_forward_impl.1} parent=1 // pred_region
      %35 = vsyncadd [#allocation6], 0
      %s36 = sshll.u32 %s3, 4
      %s37 = int_to_ptr.hbm [resolvable:$true] %s36
      %s38 = sshll.u32 [#allocation5], 4
      %s39 = int_to_ptr.vmem [resolvable:$true] %s38
      %44 = dma.hbm_to_vmem [thread:$0]  %s37, 4096, %s39, [#allocation6], 64, 64, 4
    $region17: #{_forward_impl.1} parent=1 // pred_fallthru
      _
    // Predicated region
    $region18: #{_forward_impl.1} parent=1 // pred_check
      _
    $region19: #{_forward_impl.1} parent=1 // pred_check_branch
      %46 = sbr.rel (0) target = $region21
    $region20: #{_forward_impl.1} parent=1 // pred_region
      _
    $region21: #{_forward_impl.1} parent=1 // pred_fallthru
      _
    // Predicated region
    $region22: #{_forward_impl.1} parent=1 // pred_check
      _
    $region23: #{_forward_impl.1} parent=1 // pred_check_branch
      %48 = sbr.rel (0) target = $region25
    $region24: #{_forward_impl.1} parent=1 // pred_region
      %50 = vsyncadd [#allocation6], 0
      %s51 = sshll.u32 %s5, 4
      %s52 = int_to_ptr.hbm [resolvable:$true] %s51
      %s53 = sshll.u32 [#allocation7], 4
      %s54 = int_to_ptr.vmem [resolvable:$true] %s53
      %59 = dma.hbm_to_vmem [thread:$0]  %s52, 1024, %s54, [#allocation6], 64, 64, 4
    $region25: #{_forward_impl.1} parent=1 // pred_fallthru
      _
    // Predicated region
    $region26: #{_forward_impl.1} parent=1 // pred_check
      _
    $region27: #{_forward_impl.1} parent=1 // pred_check_branch
      %61 = sbr.rel (0) target = $region29
    $region28: #{_forward_impl.1} parent=1 // pred_region
      _
    $region29: #{_forward_impl.1} parent=1 // pred_fallthru
      _
    // Predicated region
    $region30: #{_forward_impl.1} parent=1 // pred_check
      _
    $region31: #{_forward_impl.1} parent=1 // pred_check_branch
      %63 = sbr.rel (0) target = $region33
    $region32: #{_forward_impl.1} parent=1 // pred_region
      %65 = dma.done [#allocation3], 2048
    $region33: #{_forward_impl.1} parent=1 // pred_fallthru
      _
    // Predicated region
    $region34: #{_forward_impl.1} parent=1 // pred_check
      _
    $region35: #{_forward_impl.1} parent=1 // pred_check_branch
      %67 = sbr.rel (0) target = $region37
    $region36: #{_forward_impl.1} parent=1 // pred_region
      %69 = dma.done [#allocation6], 4096
    $region37: #{_forward_impl.1} parent=1 // pred_fallthru
      _
    // Predicated region
    $region38: #{_forward_impl.1} parent=1 // pred_check
      _
    $region39: #{_forward_impl.1} parent=1 // pred_check_branch
      %71 = sbr.rel (0) target = $region41
    $region40: #{_forward_impl.1} parent=1 // pred_region
      %73 = dma.done [#allocation6], 1024
    $region41: #{_forward_impl.1} parent=1 // pred_fallthru
      _
    %v75 = vld [vmem:[%s0] sm:$0x3]
    %v76 = vpack.c.bf16 %v75, %v75
    %v77 = vld [vmem:[#allocation2] sm:$0xff]
    %v78 = vld [vmem:[#allocation2 + $0x8] sm:$0xff]
    %v79 = vld [vmem:[#allocation2 + $0x10] sm:$0xff]
    %v80 = vld [vmem:[#allocation2 + $0x18] sm:$0xff]
    %v81 = vld [vmem:[#allocation2 + $0x20] sm:$0xff]
    %v82 = vld [vmem:[#allocation2 + $0x28] sm:$0xff]
    %v83 = vld [vmem:[#allocation2 + $0x30] sm:$0xff]
    %v84 = vld [vmem:[#allocation2 + $0x38] sm:$0xff]
    %v85 = vld [vmem:[#allocation2 + $0x40] sm:$0xff]
    %v86 = vld [vmem:[#allocation2 + $0x48] sm:$0xff]
    %v87 = vld [vmem:[#allocation2 + $0x50] sm:$0xff]
    %v88 = vld [vmem:[#allocation2 + $0x58] sm:$0xff]
    %v89 = vld [vmem:[#allocation2 + $0x60] sm:$0xff]
    %v90 = vld [vmem:[#allocation2 + $0x68] sm:$0xff]
    %v91 = vld [vmem:[#allocation2 + $0x70] sm:$0xff]
    %v92 = vld [vmem:[#allocation2 + $0x78] sm:$0xff]
    %v93 = vld [vmem:[%s2] sm:$0xf]
    %v95 = vperm.slane %v93, 0
    %v96 = vperm.slane %v93, 1
    %v97 = vperm.slane %v93, 2
    %v98 = vperm.slane %v93, 3
    %v119 = vunpack.c.l.b16 %v77
    %v120 = vunpack.c.h.b16 %v77
    %v121 = vunpack.c.l.b16 %v78
    %v122 = vunpack.c.h.b16 %v78
    %v123 = vunpack.c.l.b16 %v79
    %v124 = vunpack.c.h.b16 %v79
    %v125 = vunpack.c.l.b16 %v80
    %v126 = vunpack.c.h.b16 %v80
    %v127 = vunpack.c.l.b16 %v81
    %v128 = vunpack.c.h.b16 %v81
    %v129 = vunpack.c.l.b16 %v82
    %v130 = vunpack.c.h.b16 %v82
    %v131 = vunpack.c.l.b16 %v83
    %v132 = vunpack.c.h.b16 %v83
    %v133 = vunpack.c.l.b16 %v84
    %v134 = vunpack.c.h.b16 %v84
    %v135 = vunpack.c.l.b16 %v85
    %v136 = vunpack.c.h.b16 %v85
    %v137 = vunpack.c.l.b16 %v86
    %v138 = vunpack.c.h.b16 %v86
    %v139 = vunpack.c.l.b16 %v87
    %v140 = vunpack.c.h.b16 %v87
    %v141 = vunpack.c.l.b16 %v88
    %v142 = vunpack.c.h.b16 %v88
    %v143 = vunpack.c.l.b16 %v89
    %v144 = vunpack.c.h.b16 %v89
    %v145 = vunpack.c.l.b16 %v90
    %v146 = vunpack.c.h.b16 %v90
    %v147 = vunpack.c.l.b16 %v91
    %v148 = vunpack.c.h.b16 %v91
    %v149 = vunpack.c.l.b16 %v92
    %v150 = vunpack.c.h.b16 %v92
    %v151 = vpack.c.b16 %v123, %v119
    %v152 = vpack.c.b16 %v124, %v120
    %v153 = vpack.c.b16 %v125, %v121
    %v154 = vpack.c.b16 %v126, %v122
    %v155 = vpack.c.b16 %v131, %v127
    %v156 = vpack.c.b16 %v132, %v128
    %v157 = vpack.c.b16 %v133, %v129
    %v158 = vpack.c.b16 %v134, %v130
    %v159 = vpack.c.b16 %v139, %v135
    %v160 = vpack.c.b16 %v140, %v136
    %v161 = vpack.c.b16 %v141, %v137
    %v162 = vpack.c.b16 %v142, %v138
    %v163 = vpack.c.b16 %v147, %v143
    %v164 = vpack.c.b16 %v148, %v144
    %v165 = vpack.c.b16 %v149, %v145
    %v166 = vpack.c.b16 %v150, %v146
    %vm183 = vcmask 523264
    %v185 = vsel %vm183, %v76, 0
    %187 = vmatpush.bf16.msra.mxu0 0
    %188 = vmatpush.bf16.msra.mxu0 0
    %189 = vmatpush.bf16.msra.mxu0 0
    %190 = vmatpush.bf16.msra.mxu0 0
    %191 = vmatpush.bf16.msra.mxu0 %v163
    %192 = vmatpush.bf16.msra.mxu0 %v159
    %193 = vmatpush.bf16.msra.mxu0 %v155
    %194 = vmatpush.bf16.msra.mxu0 %v151
    %195 = vmatmul.bf16.gmra.mxu0 %v185
    %v196 = vpop.f32.mrf.mxu0
    %v197 = vadd.f32 %v95, %v196
    %v198 = vpop.f32.mrf.mxu0
    %199 = vdwg.mxu0
    %200 = vmatpush.bf16.msra.mxu0 0
    %201 = vmatpush.bf16.msra.mxu0 0
    %202 = vmatpush.bf16.msra.mxu0 0
    %203 = vmatpush.bf16.msra.mxu0 0
    %204 = vmatpush.bf16.msra.mxu0 %v164
    %205 = vmatpush.bf16.msra.mxu0 %v160
    %206 = vmatpush.bf16.msra.mxu0 %v156
    %207 = vmatpush.bf16.msra.mxu0 %v152
    %208 = vmatmul.bf16.gmra.mxu0 %v185
    %v209 = vpop.f32.mrf.mxu0
    %v210 = vadd.f32 %v96, %v209
    %v211 = vpop.f32.mrf.mxu0
    %212 = vdwg.mxu0
    %213 = vmatpush.bf16.msra.mxu0 0
    %214 = vmatpush.bf16.msra.mxu0 0
    %215 = vmatpush.bf16.msra.mxu0 0
    %216 = vmatpush.bf16.msra.mxu0 0
    %217 = vmatpush.bf16.msra.mxu0 %v165
    %218 = vmatpush.bf16.msra.mxu0 %v161
    %219 = vmatpush.bf16.msra.mxu0 %v157
    %220 = vmatpush.bf16.msra.mxu0 %v153
    %221 = vmatmul.bf16.gmra.mxu0 %v185
    %v222 = vpop.f32.mrf.mxu0
    %v223 = vadd.f32 %v97, %v222
    %v224 = vpop.f32.mrf.mxu0
    %225 = vdwg.mxu0
    %226 = vmatpush.bf16.msra.mxu0 0
    %227 = vmatpush.bf16.msra.mxu0 0
    %228 = vmatpush.bf16.msra.mxu0 0
    %229 = vmatpush.bf16.msra.mxu0 0
    %230 = vmatpush.bf16.msra.mxu0 %v166
    %231 = vmatpush.bf16.msra.mxu0 %v162
    %232 = vmatpush.bf16.msra.mxu0 %v158
    %233 = vmatpush.bf16.msra.mxu0 %v154
    %234 = vmatmul.bf16.gmra.mxu0 %v185
    %v235 = vpop.f32.mrf.mxu0
    %v236 = vadd.f32 %v98, %v235
    %v237 = vpop.f32.mrf.mxu0
    %238 = vdwg.mxu0
    %v239 = vmax.f32 %v197, 0.0
    %v240 = vmax.f32 %v210, 0.0
    %v241 = vmax.f32 %v223, 0.0
    %v242 = vmax.f32 %v236, 0.0
    %v243 = vpack.c.bf16 %v239, %v239
    %v244 = vpack.c.bf16 %v240, %v240
    %v245 = vpack.c.bf16 %v241, %v241
    %v246 = vpack.c.bf16 %v242, %v242
    %v247 = vld [vmem:[#allocation5] sm:$0xf]
    %v248 = vld [vmem:[#allocation5 + $0x4] sm:$0xf]
    %v249 = vld [vmem:[#allocation5 + $0x8] sm:$0xf]
    %v250 = vld [vmem:[#allocation5 + $0xc] sm:$0xf]
    %v251 = vld [vmem:[#allocation5 + $0x10] sm:$0xf]
    %v252 = vld [vmem:[#allocation5 + $0x14] sm:$0xf]
    %v253 = vld [vmem:[#allocation5 + $0x18] sm:$0xf]
    %v254 = vld [vmem:[#allocation5 + $0x1c] sm:$0xf]
    %v255 = vld [vmem:[#allocation5 + $0x20] sm:$0xf]
    %v256 = vld [vmem:[#allocation5 + $0x24] sm:$0xf]
    %v257 = vld [vmem:[#allocation5 + $0x28] sm:$0xf]
    %v258 = vld [vmem:[#allocation5 + $0x2c] sm:$0xf]
    %v259 = vld [vmem:[#allocation5 + $0x30] sm:$0xf]
    %v260 = vld [vmem:[#allocation5 + $0x34] sm:$0xf]
    %v261 = vld [vmem:[#allocation5 + $0x38] sm:$0xf]
    %v262 = vld [vmem:[#allocation5 + $0x3c] sm:$0xf]
    %v263 = vld [vmem:[#allocation5 + $0x40] sm:$0xf]
    %v264 = vld [vmem:[#allocation5 + $0x44] sm:$0xf]
    %v265 = vld [vmem:[#allocation5 + $0x48] sm:$0xf]
    %v266 = vld [vmem:[#allocation5 + $0x4c] sm:$0xf]
    %v267 = vld [vmem:[#allocation5 + $0x50] sm:$0xf]
    %v268 = vld [vmem:[#allocation5 + $0x54] sm:$0xf]
    %v269 = vld [vmem:[#allocation5 + $0x58] sm:$0xf]
    %v270 = vld [vmem:[#allocation5 + $0x5c] sm:$0xf]
    %v271 = vld [vmem:[#allocation5 + $0x60] sm:$0xf]
    %v272 = vld [vmem:[#allocation5 + $0x64] sm:$0xf]
    %v273 = vld [vmem:[#allocation5 + $0x68] sm:$0xf]
    %v274 = vld [vmem:[#allocation5 + $0x6c] sm:$0xf]
    %v275 = vld [vmem:[#allocation5 + $0x70] sm:$0xf]
    %v276 = vld [vmem:[#allocation5 + $0x74] sm:$0xf]
    %v277 = vld [vmem:[#allocation5 + $0x78] sm:$0xf]
    %v278 = vld [vmem:[#allocation5 + $0x7c] sm:$0xf]
    %v279 = vld [vmem:[#allocation5 + $0x80] sm:$0xf]
    %v280 = vld [vmem:[#allocation5 + $0x84] sm:$0xf]
    %v281 = vld [vmem:[#allocation5 + $0x88] sm:$0xf]
    %v282 = vld [vmem:[#allocation5 + $0x8c] sm:$0xf]
    %v283 = vld [vmem:[#allocation5 + $0x90] sm:$0xf]
    %v284 = vld [vmem:[#allocation5 + $0x94] sm:$0xf]
    %v285 = vld [vmem:[#allocation5 + $0x98] sm:$0xf]
    %v286 = vld [vmem:[#allocation5 + $0x9c] sm:$0xf]
    %v287 = vld [vmem:[#allocation5 + $0xa0] sm:$0xf]
    %v288 = vld [vmem:[#allocation5 + $0xa4] sm:$0xf]
    %v289 = vld [vmem:[#allocation5 + $0xa8] sm:$0xf]
    %v290 = vld [vmem:[#allocation5 + $0xac] sm:$0xf]
    %v291 = vld [vmem:[#allocation5 + $0xb0] sm:$0xf]
    %v292 = vld [vmem:[#allocation5 + $0xb4] sm:$0xf]
    %v293 = vld [vmem:[#allocation5 + $0xb8] sm:$0xf]
    %v294 = vld [vmem:[#allocation5 + $0xbc] sm:$0xf]
    %v295 = vld [vmem:[#allocation5 + $0xc0] sm:$0xf]
    %v296 = vld [vmem:[#allocation5 + $0xc4] sm:$0xf]
    %v297 = vld [vmem:[#allocation5 + $0xc8] sm:$0xf]
    %v298 = vld [vmem:[#allocation5 + $0xcc] sm:$0xf]
    %v299 = vld [vmem:[#allocation5 + $0xd0] sm:$0xf]
    %v300 = vld [vmem:[#allocation5 + $0xd4] sm:$0xf]
    %v301 = vld [vmem:[#allocation5 + $0xd8] sm:$0xf]
    %v302 = vld [vmem:[#allocation5 + $0xdc] sm:$0xf]
    %v303 = vld [vmem:[#allocation5 + $0xe0] sm:$0xf]
    %v304 = vld [vmem:[#allocation5 + $0xe4] sm:$0xf]
    %v305 = vld [vmem:[#allocation5 + $0xe8] sm:$0xf]
    %v306 = vld [vmem:[#allocation5 + $0xec] sm:$0xf]
    %v307 = vld [vmem:[#allocation5 + $0xf0] sm:$0xf]
    %v308 = vld [vmem:[#allocation5 + $0xf4] sm:$0xf]
    %v309 = vld [vmem:[#allocation5 + $0xf8] sm:$0xf]
    %v310 = vld [vmem:[#allocation5 + $0xfc] sm:$0xf]
    %v311 = vld [vmem:[%s4] sm:$0x1]
    %v313 = vperm.slane %v311, 0
    %v379 = vunpack.c.l.b16 %v247
    %v380 = vunpack.c.l.b16 %v248
    %v381 = vunpack.c.l.b16 %v249
    %v382 = vunpack.c.l.b16 %v250
    %v383 = vunpack.c.l.b16 %v251
    %v384 = vunpack.c.l.b16 %v252
    %v385 = vunpack.c.l.b16 %v253
    %v386 = vunpack.c.l.b16 %v254
    %v387 = vunpack.c.l.b16 %v255
    %v388 = vunpack.c.l.b16 %v256
    %v389 = vunpack.c.l.b16 %v257
    %v390 = vunpack.c.l.b16 %v258
    %v391 = vunpack.c.l.b16 %v259
    %v392 = vunpack.c.l.b16 %v260
    %v393 = vunpack.c.l.b16 %v261
    %v394 = vunpack.c.l.b16 %v262
    %v395 = vunpack.c.l.b16 %v263
    %v396 = vunpack.c.l.b16 %v264
    %v397 = vunpack.c.l.b16 %v265
    %v398 = vunpack.c.l.b16 %v266
    %v399 = vunpack.c.l.b16 %v267
    %v400 = vunpack.c.l.b16 %v268
    %v401 = vunpack.c.l.b16 %v269
    %v402 = vunpack.c.l.b16 %v270
    %v403 = vunpack.c.l.b16 %v271
    %v404 = vunpack.c.l.b16 %v272
    %v405 = vunpack.c.l.b16 %v273
    %v406 = vunpack.c.l.b16 %v274
    %v407 = vunpack.c.l.b16 %v275
    %v408 = vunpack.c.l.b16 %v276
    %v409 = vunpack.c.l.b16 %v277
    %v410 = vunpack.c.l.b16 %v278
    %v411 = vunpack.c.l.b16 %v279
    %v412 = vunpack.c.l.b16 %v280
    %v413 = vunpack.c.l.b16 %v281
    %v414 = vunpack.c.l.b16 %v282
    %v415 = vunpack.c.l.b16 %v283
    %v416 = vunpack.c.l.b16 %v284
    %v417 = vunpack.c.l.b16 %v285
    %v418 = vunpack.c.l.b16 %v286
    %v419 = vunpack.c.l.b16 %v287
    %v420 = vunpack.c.l.b16 %v288
    %v421 = vunpack.c.l.b16 %v289
    %v422 = vunpack.c.l.b16 %v290
    %v423 = vunpack.c.l.b16 %v291
    %v424 = vunpack.c.l.b16 %v292
    %v425 = vunpack.c.l.b16 %v293
    %v426 = vunpack.c.l.b16 %v294
    %v427 = vunpack.c.l.b16 %v295
    %v428 = vunpack.c.l.b16 %v296
    %v429 = vunpack.c.l.b16 %v297
    %v430 = vunpack.c.l.b16 %v298
    %v431 = vunpack.c.l.b16 %v299
    %v432 = vunpack.c.l.b16 %v300
    %v433 = vunpack.c.l.b16 %v301
    %v434 = vunpack.c.l.b16 %v302
    %v435 = vunpack.c.l.b16 %v303
    %v436 = vunpack.c.l.b16 %v304
    %v437 = vunpack.c.l.b16 %v305
    %v438 = vunpack.c.l.b16 %v306
    %v439 = vunpack.c.l.b16 %v307
    %v440 = vunpack.c.l.b16 %v308
    %v441 = vunpack.c.l.b16 %v309
    %v442 = vunpack.c.l.b16 %v310
    %v443 = vpack.c.b16 %v380, %v379
    %v444 = vpack.c.b16 %v382, %v381
    %v445 = vpack.c.b16 %v384, %v383
    %v446 = vpack.c.b16 %v386, %v385
    %v447 = vpack.c.b16 %v388, %v387
    %v448 = vpack.c.b16 %v390, %v389
    %v449 = vpack.c.b16 %v392, %v391
    %v450 = vpack.c.b16 %v394, %v393
    %v451 = vpack.c.b16 %v396, %v395
    %v452 = vpack.c.b16 %v398, %v397
    %v453 = vpack.c.b16 %v400, %v399
    %v454 = vpack.c.b16 %v402, %v401
    %v455 = vpack.c.b16 %v404, %v403
    %v456 = vpack.c.b16 %v406, %v405
    %v457 = vpack.c.b16 %v408, %v407
    %v458 = vpack.c.b16 %v410, %v409
    %v459 = vpack.c.b16 %v412, %v411
    %v460 = vpack.c.b16 %v414, %v413
    %v461 = vpack.c.b16 %v416, %v415
    %v462 = vpack.c.b16 %v418, %v417
    %v463 = vpack.c.b16 %v420, %v419
    %v464 = vpack.c.b16 %v422, %v421
    %v465 = vpack.c.b16 %v424, %v423
    %v466 = vpack.c.b16 %v426, %v425
    %v467 = vpack.c.b16 %v428, %v427
    %v468 = vpack.c.b16 %v430, %v429
    %v469 = vpack.c.b16 %v432, %v431
    %v470 = vpack.c.b16 %v434, %v433
    %v471 = vpack.c.b16 %v436, %v435
    %v472 = vpack.c.b16 %v438, %v437
    %v473 = vpack.c.b16 %v440, %v439
    %v474 = vpack.c.b16 %v442, %v441
    %507 = vmatpush.bf16.msra.mxu0 %v450
    %508 = vmatpush.bf16.msra.mxu0 %v449
    %509 = vmatpush.bf16.msra.mxu0 %v448
    %510 = vmatpush.bf16.msra.mxu0 %v447
    %511 = vmatpush.bf16.msra.mxu0 %v446
    %512 = vmatpush.bf16.msra.mxu0 %v445
    %513 = vmatpush.bf16.msra.mxu0 %v444
    %514 = vmatpush.bf16.msra.mxu0 %v443
    %515 = vmatmul.bf16.gmra.mxu0 %v243
    %v516 = vpop.f32.mrf.mxu0
    %v517 = vadd.f32 %v313, %v516
    %v518 = vpop.f32.mrf.mxu0
    %519 = vdwg.mxu0
    %520 = vmatpush.bf16.msra.mxu0 %v458
    %521 = vmatpush.bf16.msra.mxu0 %v457
    %522 = vmatpush.bf16.msra.mxu0 %v456
    %523 = vmatpush.bf16.msra.mxu0 %v455
    %524 = vmatpush.bf16.msra.mxu0 %v454
    %525 = vmatpush.bf16.msra.mxu0 %v453
    %526 = vmatpush.bf16.msra.mxu0 %v452
    %527 = vmatpush.bf16.msra.mxu0 %v451
    %528 = vmatmul.bf16.gmra.mxu0 %v244
    %v529 = vpop.f32.mrf.mxu0
    %v530 = vadd.f32 %v517, %v529
    %v531 = vpop.f32.mrf.mxu0
    %532 = vdwg.mxu0
    %533 = vmatpush.bf16.msra.mxu0 %v466
    %534 = vmatpush.bf16.msra.mxu0 %v465
    %535 = vmatpush.bf16.msra.mxu0 %v464
    %536 = vmatpush.bf16.msra.mxu0 %v463
    %537 = vmatpush.bf16.msra.mxu0 %v462
    %538 = vmatpush.bf16.msra.mxu0 %v461
    %539 = vmatpush.bf16.msra.mxu0 %v460
    %540 = vmatpush.bf16.msra.mxu0 %v459
    %541 = vmatmul.bf16.gmra.mxu0 %v245
    %v542 = vpop.f32.mrf.mxu0
    %v543 = vadd.f32 %v530, %v542
    %v544 = vpop.f32.mrf.mxu0
    %545 = vdwg.mxu0
    %546 = vmatpush.bf16.msra.mxu0 %v474
    %547 = vmatpush.bf16.msra.mxu0 %v473
    %548 = vmatpush.bf16.msra.mxu0 %v472
    %549 = vmatpush.bf16.msra.mxu0 %v471
    %550 = vmatpush.bf16.msra.mxu0 %v470
    %551 = vmatpush.bf16.msra.mxu0 %v469
    %552 = vmatpush.bf16.msra.mxu0 %v468
    %553 = vmatpush.bf16.msra.mxu0 %v467
    %554 = vmatmul.bf16.gmra.mxu0 %v246
    %v555 = vpop.f32.mrf.mxu0
    %v556 = vadd.f32 %v543, %v555
    %v557 = vpop.f32.mrf.mxu0
    %558 = vdwg.mxu0
    %v559 = vmax.f32 %v556, 0.0
    %v560 = vpack.c.bf16 %v559, %v559
    %v561 = vld [vmem:[#allocation7] sm:$0xf]
    %v562 = vld [vmem:[#allocation7 + $0x4] sm:$0xf]
    %v563 = vld [vmem:[#allocation7 + $0x8] sm:$0xf]
    %v564 = vld [vmem:[#allocation7 + $0xc] sm:$0xf]
    %v565 = vld [vmem:[#allocation7 + $0x10] sm:$0xf]
    %v566 = vld [vmem:[#allocation7 + $0x14] sm:$0xf]
    %v567 = vld [vmem:[#allocation7 + $0x18] sm:$0xf]
    %v568 = vld [vmem:[#allocation7 + $0x1c] sm:$0xf]
    %v569 = vld [vmem:[#allocation7 + $0x20] sm:$0xf]
    %v570 = vld [vmem:[#allocation7 + $0x24] sm:$0xf]
    %v571 = vld [vmem:[#allocation7 + $0x28] sm:$0xf]
    %v572 = vld [vmem:[#allocation7 + $0x2c] sm:$0xf]
    %v573 = vld [vmem:[#allocation7 + $0x30] sm:$0xf]
    %v574 = vld [vmem:[#allocation7 + $0x34] sm:$0xf]
    %v575 = vld [vmem:[#allocation7 + $0x38] sm:$0xf]
    %v576 = vld [vmem:[#allocation7 + $0x3c] sm:$0xf]
    %v577 = vld [vmem:[%s6] sm:$0x1]
    %v579 = vperm.slane %v577, 0
    %v597 = vunpack.c.l.b16 %v561
    %v598 = vunpack.c.l.b16 %v562
    %v599 = vunpack.c.l.b16 %v563
    %v600 = vunpack.c.l.b16 %v564
    %v601 = vunpack.c.l.b16 %v565
    %v602 = vunpack.c.l.b16 %v566
    %v603 = vunpack.c.l.b16 %v567
    %v604 = vunpack.c.l.b16 %v568
    %v605 = vunpack.c.l.b16 %v569
    %v606 = vunpack.c.l.b16 %v570
    %v607 = vunpack.c.l.b16 %v571
    %v608 = vunpack.c.l.b16 %v572
    %v609 = vunpack.c.l.b16 %v573
    %v610 = vunpack.c.l.b16 %v574
    %v611 = vunpack.c.l.b16 %v575
    %v612 = vunpack.c.l.b16 %v576
    %v613 = vpack.c.b16 %v598, %v597
    %v614 = vpack.c.b16 %v600, %v599
    %v615 = vpack.c.b16 %v602, %v601
    %v616 = vpack.c.b16 %v604, %v603
    %v617 = vpack.c.b16 %v606, %v605
    %v618 = vpack.c.b16 %v608, %v607
    %v619 = vpack.c.b16 %v610, %v609
    %v620 = vpack.c.b16 %v612, %v611
    %629 = vmatpush.bf16.msra.mxu0 %v620
    %630 = vmatpush.bf16.msra.mxu0 %v619
    %631 = vmatpush.bf16.msra.mxu0 %v618
    %632 = vmatpush.bf16.msra.mxu0 %v617
    %633 = vmatpush.bf16.msra.mxu0 %v616
    %634 = vmatpush.bf16.msra.mxu0 %v615
    %635 = vmatpush.bf16.msra.mxu0 %v614
    %636 = vmatpush.bf16.msra.mxu0 %v613
    %637 = vmatmul.bf16.gmra.mxu0 %v560
    %v638 = vpop.f32.mrf.mxu0
    %v639 = vadd.f32 %v579, %v638
    %v640 = vpop.f32.mrf.mxu0
    %641 = vdwg.mxu0
    %v642 = vxor.u32 %v639, 2147483648
    %v643 = vmul.f32 %v642, 1.442695
    %v644 = vpow.pop %v643
    %v645 = vadd.f32 %v644, 1.0
    %v646 = vrcp.pop %v645
    %v647 = vmul.f32 %v645, %v646
    %v648 = vsub.f32 1.0, %v647
    %v649 = vmul.f32 %v646, %v648
    %v650 = vadd.f32 %v646, %v649
    %vm651 = vweird.f32 %v645
    %vm652 = vweird.f32 %v646
    %vm653 = vmor %vm651, %vm652
    %v654 = vsel %vm653, %v646, %v650
    %v655 = vand.u32 2147483647, %v645
    %vm656 = vcmp.eq.f32.partialorder %v655, 8.507059e+37
    %v657 = vand.u32 %v645, 2147483648
    %v658 = vor.u32 1.1754944e-38, %v657
    %v659 = vsel %vm656, %v658, %v654
    %v660 = vmul.f32 1.0, %v659
    %v661 = vpack.c.bf16 %v660, %v660
    %662 = vst [vmem:[#allocation8] sm:$0x1] %v661
    // Predicated region
    $region42: #{_forward_impl.1} parent=1 // pred_check
      _
    $region43: #{_forward_impl.1} parent=1 // pred_check_branch
      %664 = sbr.rel (0) target = $region45
    $region44: #{_forward_impl.1} parent=1 // pred_region
      %666 = vsyncadd [#allocation4], 0
      %s668 = sshll.u32 [#allocation8], 4
      %s669 = int_to_ptr.vmem [resolvable:$true] %s668
      %s670 = sshll.u32 %s7, 4
      %s671 = int_to_ptr.hbm [resolvable:$true] %s670
      %673 = dma.vmem_to_hbm [thread:$0]  %s669, 16, %s671, [#allocation4]
    $region45: #{_forward_impl.1} parent=1 // pred_fallthru
      _
    // Predicated region
    $region46: #{_forward_impl.1} parent=1 // pred_check
      _
    $region47: #{_forward_impl.1} parent=1 // pred_check_branch
      %675 = sbr.rel (0) target = $region49
    $region48: #{_forward_impl.1} parent=1 // pred_region
      %677 = dma.done [#allocation4], 16
    $region49: #{_forward_impl.1} parent=1 // pred_fallthru
      _
    %678 = vsyncpa [#allocation3], 1
    %679 = vsyncpa [#allocation6], 1
    %680 = vsyncpa [#allocation4], 1

</llo_original>
